<compile_context>
chip_gen: v7x
topology: tpu7x:2x2x1
jax: 0.10.0
libtpu: 0.0.40
codegen_flags: <defaults>
</compile_context>

<pallas_src>
import jax
import jax.numpy as jnp
from jax import lax
from jax.experimental import pallas as pl
from jax.experimental.pallas import tpu as pltpu


_FUSED_VMEM_BUDGET = 20 * 1024 * 1024   # take the fused path below this
_TILE_VMEM_BUDGET = 20 * 1024 * 1024    # per-pass working-set target
_VMEM_LIMIT = 40 * 1024 * 1024          # safe on v5e/v6e (128 MiB) and v7x (64 MiB)


def _round_up(x, m):
    return ((x + m - 1) // m) * m


def _tile_candidates(dim, cands, prefer_multi=False):
    """Tile sizes (descending) that divide `dim`; optionally prefer sizes that
    leave >= 2 blocks so megacore ('parallel') axes can use both v7x cores."""
    divs = [c for c in cands if dim % c == 0]
    if not divs:
        return [dim]
    if prefer_multi:
        multi = [c for c in divs if dim // c >= 2]
        rest = [c for c in divs if dim // c < 2]
        if multi:
            return multi + rest
    return divs


def _fused_vmem_bytes(n_pad, f_pad, h1_pad, h2_pad):
    # Whole-array operands/outputs resident in VMEM (single invocation,
    # no pipelining) plus f32 temporaries for h1 / z.
    return (2 * (n_pad * f_pad + f_pad * h1_pad + h1_pad * h2_pad)   # bf16 x, W1^T, W2^T
            + 4 * (h1_pad + h2_pad)                                  # biases (f32)
            + 2 * n_pad * n_pad + 4 * n_pad * h2_pad                 # adj (bf16), z (f32)
            + 4 * n_pad * (h1_pad + h2_pad) + 2 * n_pad * h2_pad)    # h1/z/zb temporaries


def _pick_z_tiles(n_pad, f_pad, h1_pad, h2_pad, budget=_TILE_VMEM_BUDGET):
    """Row tile (tz) and K tile (tk) for the z-pass, sized to the VMEM budget."""
    def vmem(tz, tk):
        return (2 * 2 * (tz * tk + tk * h1_pad)     # x + W1^T blocks (bf16, double-buffered)
                + 2 * 2 * h1_pad * h2_pad           # W2^T (bf16, double-buffered)
                + 2 * tz * h2_pad * (4 + 2)         # z f32 + bf16 output blocks (double-buffered)
                + 4 * tz * h1_pad                   # f32 h1 accumulator scratch
                + 2 * 4 * (h1_pad + h2_pad))        # biases
    for tz in _tile_candidates(n_pad, (512, 256, 128), prefer_multi=True):
        for tk in _tile_candidates(f_pad, (512, 256, 128)):
            if vmem(tz, tk) <= budget:
                return tz, tk
    # TODO(synk): also K-tile the hidden dim for extreme hidden_dim1.
    return _tile_candidates(n_pad, (128,))[0], _tile_candidates(f_pad, (128,))[0]


def _pick_adj_tile(n_pad, h2_pad, budget=_TILE_VMEM_BUDGET):
    for t in _tile_candidates(n_pad, (1024, 512, 256, 128), prefer_multi=True):
        if 2 * (2 * t * h2_pad * 2 + t * t * 2) <= budget:
            return t
    return _tile_candidates(n_pad, (128,))[0]


# ----------------------------- kernels --------------------------------------


def _fused_kernel(x_ref, w1t_ref, b1_ref, w2t_ref, b2_ref, adj_ref, z_ref):
    """Small-graph path: everything resident in VMEM, single invocation."""
    # bf16 operands, f32 accumulation; bias adds in f32 (VPU-friendly on v5e).
    h1 = jnp.dot(x_ref[...], w1t_ref[...],
                 preferred_element_type=jnp.float32) + b1_ref[...]
    z = jnp.dot(h1.astype(jnp.bfloat16), w2t_ref[...],
                preferred_element_type=jnp.float32) + b2_ref[...]
    z_ref[...] = z.astype(z_ref.dtype)
    zb = z.astype(jnp.bfloat16)
    # adj = z @ z.T : NT contraction (same pattern as flash-attention q @ k.T).
    adj_ref[...] = lax.dot_general(
        zb, zb, dimension_numbers=(((1,), (1,)), ((), ())),
        preferred_element_type=jnp.float32).astype(adj_ref.dtype)


def _z_kernel(x_ref, w1t_ref, b1_ref, w2t_ref, b2_ref, zf_ref, zb_ref, h1_acc):
    """Tiled z-pass: K-tiled first linear with f32 accumulator, fused second
    linear + bias epilogue on the last K step."""
    k = pl.program_id(1)

    @pl.when(k == 0)
    def _():
        h1_acc[...] = jnp.zeros_like(h1_acc)

    h1_acc[...] += jnp.dot(x_ref[...], w1t_ref[...],
                           preferred_element_type=jnp.float32)

    @pl.when(k == pl.num_programs(1) - 1)
    def _():
        h1 = h1_acc[...] + b1_ref[...]                       # f32 bias add
        z = jnp.dot(h1.astype(jnp.bfloat16), w2t_ref[...],
                    preferred_element_type=jnp.float32) + b2_ref[...]
        zf_ref[...] = z.astype(zf_ref.dtype)                 # f32 z (returned)
        zb_ref[...] = z.astype(jnp.bfloat16)                 # bf16 z (adj feed)


def _adj_kernel(zi_ref, zj_ref, adj_ref):
    # adj tile = z_i @ z_j.T (NT form, no relayout of z_j); f32 accumulate,
    # bf16 store to halve the N^2 HBM writeback.
    adj_ref[...] = lax.dot_general(
        zi_ref[...], zj_ref[...],
        dimension_numbers=(((1,), (1,)), ((), ())),
        preferred_element_type=jnp.float32).astype(adj_ref.dtype)


# ----------------------------- wrapper ---------------------------------------


def ae_forward(x, w1, b1, w2, b2, fuse=None):
    """AE forward.

    x: [N, F]; w1: [H1, F]; b1: [H1]; w2: [H2, H1]; b2: [H2] (PyTorch layout).
    Returns (adj, z): adj is bf16 (z @ z.T, writeback-bound -> narrow store),
    z is f32.  Pass fuse=True/False to force the fused / tiled path.
    """
    n, f = x.shape
    h1_dim, h2_dim = w1.shape[0], w2.shape[0]

    n_pad = _round_up(n, 128)
    f_pad = _round_up(f, 128)
    h1_pad = _round_up(h1_dim, 128)
    h2_pad = _round_up(h2_dim, 128)

    bf16, f32 = jnp.bfloat16, jnp.float32

    # bf16 MXU operands; weights pre-transposed once to [in, out] so every
    # weight contraction in-kernel is a canonical (m,k)@(k,n) MXU matmul.
    x_p = jnp.pad(x.astype(bf16), ((0, n_pad - n), (0, f_pad - f)))
    w1t_p = jnp.pad(w1.T.astype(bf16), ((0, f_pad - f), (0, h1_pad - h1_dim)))
    w2t_p = jnp.pad(w2.T.astype(bf16), ((0, h1_pad - h1_dim), (0, h2_pad - h2_dim)))
    b1_p = jnp.pad(b1.astype(f32), (0, h1_pad - h1_dim)).reshape(1, h1_pad)
    b2_p = jnp.pad(b2.astype(f32), (0, h2_pad - h2_dim)).reshape(1, h2_pad)

    if fuse is None:
        fuse = _fused_vmem_bytes(n_pad, f_pad, h1_pad, h2_pad) <= _FUSED_VMEM_BUDGET

    if fuse:
        # Single launch; z never round-trips through HBM between the two
        # stages.  (Leaves one v7x core idle — acceptable at these sizes.)
        fused_cost = pl.CostEstimate(
            flops=2 * n_pad * (f_pad * h1_pad + h1_pad * h2_pad + n_pad * h2_pad),
            transcendentals=0,
            bytes_accessed=(2 * (n_pad * f_pad + f_pad * h1_pad + h1_pad * h2_pad)
                            + 4 * (h1_pad + h2_pad)
                            + 2 * n_pad * n_pad + 4 * n_pad * h2_pad),
        )
        adj_pad, z_pad = pl.pallas_call(
            _fused_kernel,
            out_shape=(jax.ShapeDtypeStruct((n_pad, n_pad), bf16),
                       jax.ShapeDtypeStruct((n_pad, h2_pad), f32)),
            cost_estimate=fused_cost,
        )(x_p, w1t_p, b1_p, w2t_p, b2_p)
        return adj_pad[:n, :n], z_pad[:n, :h2_dim]

    # ----------------- pass 1: z = (x @ W1.T + b1) @ W2.T + b2 ---------------
    tz, tk = _pick_z_tiles(n_pad, f_pad, h1_pad, h2_pad)
    z_cost = pl.CostEstimate(
        flops=2 * n_pad * (f_pad * h1_pad + h1_pad * h2_pad),
        transcendentals=0,
        bytes_accessed=(2 * n_pad * f_pad                      # x (bf16)
                        + 2 * (n_pad // tz) * f_pad * h1_pad   # W1^T re-streamed per row block
                        + 2 * h1_pad * h2_pad
                        + 4 * (h1_pad + h2_pad)
                        + (4 + 2) * n_pad * h2_pad),           # z f32 + bf16 writebacks
    )
    z_f32, z_b16 = pl.pallas_call(
        _z_kernel,
        out_shape=(jax.ShapeDtypeStruct((n_pad, h2_pad), f32),
                   jax.ShapeDtypeStruct((n_pad, h2_pad), bf16)),
        grid=(n_pad // tz, f_pad // tk),
        in_specs=[
            pl.BlockSpec((tz, tk), lambda i, k: (i, k)),          # x row/K block (bf16)
            pl.BlockSpec((tk, h1_pad), lambda i, k: (k, 0)),      # W1^T K block (bf16)
            pl.BlockSpec((1, h1_pad), lambda i, k: (0, 0)),       # b1 (f32)
            pl.BlockSpec((h1_pad, h2_pad), lambda i, k: (0, 0)),  # W2^T (bf16, resident)
            pl.BlockSpec((1, h2_pad), lambda i, k: (0, 0)),       # b2 (f32)
        ],
        out_specs=(
            pl.BlockSpec((tz, h2_pad), lambda i, k: (i, 0)),      # z (f32, returned)
            pl.BlockSpec((tz, h2_pad), lambda i, k: (i, 0)),      # z (bf16, adj feed)
        ),
        scratch_shapes=[pltpu.VMEM((tz, h1_pad), jnp.float32)],   # h1 accumulator
        compiler_params=pltpu.CompilerParams(
            dimension_semantics=("parallel", "arbitrary"),
            vmem_limit_bytes=_VMEM_LIMIT),
        cost_estimate=z_cost,
    )(x_p, w1t_p, b1_p, w2t_p, b2_p)

    # ----------------- pass 2: adj = z @ z.T, tiled (ta, ta) ------------------
    ta = _pick_adj_tile(n_pad, h2_pad)
    nb = n_pad // ta
    adj_cost = pl.CostEstimate(
        flops=2 * n_pad * n_pad * h2_pad,
        transcendentals=0,
        bytes_accessed=2 * (n_pad * h2_pad            # z_i (once per grid row)
                            + nb * n_pad * h2_pad     # z_j re-streamed per grid row
                            + n_pad * n_pad),         # adj writeback (bf16)
    )
    adj_pad = pl.pallas_call(
        _adj_kernel,
        out_shape=jax.ShapeDtypeStruct((n_pad, n_pad), bf16),
        grid=(nb, nb),
        in_specs=[
            pl.BlockSpec((ta, h2_pad), lambda i, j: (i, 0)),      # z rows (i), bf16
            pl.BlockSpec((ta, h2_pad), lambda i, j: (j, 0)),      # z rows (j), bf16
        ],
        out_specs=pl.BlockSpec((ta, ta), lambda i, j: (i, j)),
        compiler_params=pltpu.CompilerParams(
            dimension_semantics=("parallel", "parallel"),
            vmem_limit_bytes=_VMEM_LIMIT),
        cost_estimate=adj_cost,
    )(z_b16, z_b16)

    return adj_pad[:n, :n], z_f32[:n, :h2_dim]


def init_params(key, input_feat_dim, hidden_dim1, hidden_dim2):
    """Deterministic synthetic init (Linear-like scale 1/sqrt(fan_in))."""
    k1, k2, k3, k4 = jax.random.split(key, 4)
    s1 = 1.0 / jnp.sqrt(jnp.float32(input_feat_dim))
    s2 = 1.0 / jnp.sqrt(jnp.float32(hidden_dim1))
    w1 = jax.random.uniform(k1, (hidden_dim1, input_feat_dim), jnp.float32, -s1, s1)
    b1 = jax.random.uniform(k2, (hidden_dim1,), jnp.float32, -s1, s1)
    w2 = jax.random.uniform(k3, (hidden_dim2, hidden_dim1), jnp.float32, -s2, s2)
    b2 = jax.random.uniform(k4, (hidden_dim2,), jnp.float32, -s2, s2)
    return w1, b1, w2, b2


def _check(name, got, ref, rel=6e-2):
    # bf16 MXU inputs / bf16 adj storage -> loosened (scaled) tolerance.
    got = jnp.asarray(got, jnp.float32)
    err = float(jnp.max(jnp.abs(got - ref)))
    tol = rel * float(jnp.max(jnp.abs(ref))) + 1e-2
    assert err <= tol, f"{name}: max_err={err} > tol={tol}"


if __name__ == "__main__":
    ae_jit = jax.jit(ae_forward, static_argnames=("fuse",))
    key = jax.random.PRNGKey(0)

    # Case 1: tiny graph (N=8, F=32, H1=16, H2=8) -> fused single-kernel path.
    N, F_IN, H1, H2 = 8, 32, 16, 8
    kx, kp, key = jax.random.split(key, 3)
    x = jax.random.normal(kx, (N, F_IN), jnp.float32)
    w1, b1, w2, b2 = init_params(kp, F_IN, H1, H2)
    adj, z = ae_jit(x, w1, b1, w2, b2)
    jax.block_until_ready((adj, z))
    h1_ref = x @ w1.T + b1
    z_ref = h1_ref @ w2.T + b2
    adj_ref = z_ref @ z_ref.T
    _check("z (fused)", z, z_ref)
    _check("adj (fused)", adj, adj_ref)

    # Case 2: larger graph, forced through the tiled two-pass path.
    N, F_IN, H1, H2 = 384, 200, 96, 48
    kx, kp, key = jax.random.split(key, 3)
    x = jax.random.normal(kx, (N, F_IN), jnp.float32)
    w1, b1, w2, b2 = init_params(kp, F_IN, H1, H2)
    adj, z = ae_jit(x, w1, b1, w2, b2, fuse=False)
    jax.block_until_ready((adj, z))
    h1_ref = x @ w1.T + b1
    z_ref = h1_ref @ w2.T + b2
    adj_ref = z_ref @ z_ref.T
    _check("z (tiled)", z, z_ref)
    _check("adj (tiled)", adj, adj_ref)

    print("KERNEL_OK")
</pallas_src>

<mosaic_0001>
module attributes {stable_mosaic.version = 11 : i64} {
  func.func @_fused_kernel(%arg0: memref<128x128xbf16, #tpu.memory_space<vmem>>, %arg1: memref<128x128xbf16, #tpu.memory_space<vmem>>, %arg2: memref<1x128xf32, #tpu.memory_space<vmem>>, %arg3: memref<128x128xbf16, #tpu.memory_space<vmem>>, %arg4: memref<1x128xf32, #tpu.memory_space<vmem>>, %arg5: memref<128x128xbf16, #tpu.memory_space<vmem>>, %arg6: memref<128x128xf32, #tpu.memory_space<vmem>>) attributes {dimension_semantics = [], scalar_prefetch = 0 : i64, scratch_operands = 0 : i64, tpu.core_type = #tpu.core_type<tc>} {
    %c0 = arith.constant 0 : index
    %c0_0 = arith.constant 0 : index
    %0 = vector.load %arg0[%c0, %c0_0] : memref<128x128xbf16, #tpu.memory_space<vmem>>, vector<128x128xbf16>
    %c0_1 = arith.constant 0 : index
    %c0_2 = arith.constant 0 : index
    %1 = vector.load %arg1[%c0_1, %c0_2] : memref<128x128xbf16, #tpu.memory_space<vmem>>, vector<128x128xbf16>
    %cst = arith.constant dense<0.000000e+00> : vector<128x128xf32>
    %2 = tpu.matmul %0, %1, %cst {dimension_numbers = #tpu.dot_dimension_numbers<[1], [0], [0], [1], [0, 0, 1, 1], [], []>} : vector<128x128xbf16>, vector<128x128xbf16>, vector<128x128xf32> -> vector<128x128xf32>
    %c0_3 = arith.constant 0 : index
    %c0_4 = arith.constant 0 : index
    %3 = vector.load %arg2[%c0_3, %c0_4] : memref<1x128xf32, #tpu.memory_space<vmem>>, vector<1x128xf32>
    %4 = vector.broadcast %3 : vector<1x128xf32> to vector<128x128xf32>
    %5 = arith.addf %2, %4 : vector<128x128xf32>
    %6 = arith.truncf %5 : vector<128x128xf32> to vector<128x128xbf16>
    %c0_5 = arith.constant 0 : index
    %c0_6 = arith.constant 0 : index
    %7 = vector.load %arg3[%c0_5, %c0_6] : memref<128x128xbf16, #tpu.memory_space<vmem>>, vector<128x128xbf16>
    %cst_7 = arith.constant dense<0.000000e+00> : vector<128x128xf32>
    %8 = tpu.matmul %6, %7, %cst_7 {dimension_numbers = #tpu.dot_dimension_numbers<[1], [0], [0], [1], [0, 0, 1, 1], [], []>} : vector<128x128xbf16>, vector<128x128xbf16>, vector<128x128xf32> -> vector<128x128xf32>
    %c0_8 = arith.constant 0 : index
    %c0_9 = arith.constant 0 : index
    %9 = vector.load %arg4[%c0_8, %c0_9] : memref<1x128xf32, #tpu.memory_space<vmem>>, vector<1x128xf32>
    %10 = vector.broadcast %9 : vector<1x128xf32> to vector<128x128xf32>
    %11 = arith.addf %8, %10 : vector<128x128xf32>
    %c0_10 = arith.constant 0 : index
    %c0_11 = arith.constant 0 : index
    %12 = vector.load %arg6[%c0_10, %c0_11] : memref<128x128xf32, #tpu.memory_space<vmem>>, vector<128x128xf32>
    tpu.vector_store %arg6[%c0_10, %c0_11], %11 {strides = array<i32>} : memref<128x128xf32, #tpu.memory_space<vmem>>, vector<128x128xf32>,
    %13 = arith.truncf %11 : vector<128x128xf32> to vector<128x128xbf16>
    %cst_12 = arith.constant dense<0.000000e+00> : vector<128x128xf32>
    %14 = tpu.matmul %13, %13, %cst_12 {dimension_numbers = #tpu.dot_dimension_numbers<[1], [1], [0], [0], [0, 0, 1, 0], [], []>} : vector<128x128xbf16>, vector<128x128xbf16>, vector<128x128xf32> -> vector<128x128xf32>
    %15 = arith.truncf %14 : vector<128x128xf32> to vector<128x128xbf16>
    %c0_13 = arith.constant 0 : index
    %c0_14 = arith.constant 0 : index
    %16 = vector.load %arg5[%c0_13, %c0_14] : memref<128x128xbf16, #tpu.memory_space<vmem>>, vector<128x128xbf16>
    tpu.vector_store %arg5[%c0_13, %c0_14], %15 {strides = array<i32>} : memref<128x128xbf16, #tpu.memory_space<vmem>>, vector<128x128xbf16>,
    return
  }
}

</mosaic_0001>

<llo_original>
// kernel: ae_forward.1
$region0: #{ae_forward.1}
  #allocation0 [shape = 'u32[]', space=smem, size = 0x4, offset = 0x4, fixed_abs, tag = 'smem constant byte address 0x4 - core index']
  #allocation1 [shape = 'u32[144,128]{1,0:T(1,128)}', space=vmem, size = 0x12000, scoped, tag = 'internal scratch']
  %s0 = inlined_call_operand.vmem [shape: bf16[128,128], index: 0, kind: input, shape index: {}]
  %s1 = inlined_call_operand.vmem [shape: bf16[128,128], index: 1, kind: input, shape index: {}]
  %s2 = inlined_call_operand.vmem [shape: f32[1,128], index: 2, kind: input, shape index: {}]
  %s3 = inlined_call_operand.vmem [shape: bf16[128,128], index: 3, kind: input, shape index: {}]
  %s4 = inlined_call_operand.vmem [shape: f32[1,128], index: 4, kind: input, shape index: {}]
  %s5 = inlined_call_operand.vmem [shape: bf16[128,128], index: 5, kind: output, shape index: {0}]
  %s6 = inlined_call_operand.vmem [shape: f32[128,128], index: 6, kind: output, shape index: {1}]
  %7 = xla_tuple %s5, %s6
  %s8 = sld [smem:[#allocation0]]
  $region38: #{ae_forward.1} parent=0
    _
  %s10 = ssub.s32 1, %s8
  %s11 = scalar_select 0, %s10, %s8
  // Predicated region
  $region2: #{ae_forward.1} parent=0 // pred_check
    _
  $region3: #{ae_forward.1} parent=0 // pred_check_branch
    %13 = sbr.rel (0) target = $region5
  $region4: #{ae_forward.1} parent=0 // pred_region
    _
  $region5: #{ae_forward.1} parent=0 // pred_fallthru
    _
  // Predicated region
  $region6: #{ae_forward.1} parent=0 // pred_check
    _
  $region7: #{ae_forward.1} parent=0 // pred_check_branch
    %15 = sbr.rel (0) target = $region9
  $region8: #{ae_forward.1} parent=0 // pred_region
    _
  $region9: #{ae_forward.1} parent=0 // pred_fallthru
    _
  // Predicated region
  $region10: #{ae_forward.1} parent=0 // pred_check
    _
  $region11: #{ae_forward.1} parent=0 // pred_check_branch
    %17 = sbr.rel (0) target = $region13
  $region12: #{ae_forward.1} parent=0 // pred_region
    _
  $region13: #{ae_forward.1} parent=0 // pred_fallthru
    _
  // Predicated region
  $region14: #{ae_forward.1} parent=0 // pred_check
    _
  $region15: #{ae_forward.1} parent=0 // pred_check_branch
    %19 = sbr.rel (0) target = $region17
  $region16: #{ae_forward.1} parent=0 // pred_region
    _
  $region17: #{ae_forward.1} parent=0 // pred_fallthru
    _
  // Predicated region
  $region18: #{ae_forward.1} parent=0 // pred_check
    _
  $region19: #{ae_forward.1} parent=0 // pred_check_branch
    %21 = sbr.rel (0) target = $region21
  $region20: #{ae_forward.1} parent=0 // pred_region
    _
  $region21: #{ae_forward.1} parent=0 // pred_fallthru
    _
  %v23 = vld [vmem:[%s0] sm:$0xf]
  %v24 = vld [vmem:[%s0 + $0x4] sm:$0xf]
  %v25 = vld [vmem:[%s0 + $0x8] sm:$0xf]
  %v26 = vld [vmem:[%s0 + $0xc] sm:$0xf]
  %v27 = vld [vmem:[%s0 + $0x10] sm:$0xf]
  %v28 = vld [vmem:[%s0 + $0x14] sm:$0xf]
  %v29 = vld [vmem:[%s0 + $0x18] sm:$0xf]
  %v30 = vld [vmem:[%s0 + $0x1c] sm:$0xf]
  %v31 = vld [vmem:[%s0 + $0x20] sm:$0xf]
  %v32 = vld [vmem:[%s0 + $0x24] sm:$0xf]
  %v33 = vld [vmem:[%s0 + $0x28] sm:$0xf]
  %v34 = vld [vmem:[%s0 + $0x2c] sm:$0xf]
  %v35 = vld [vmem:[%s0 + $0x30] sm:$0xf]
  %v36 = vld [vmem:[%s0 + $0x34] sm:$0xf]
  %v37 = vld [vmem:[%s0 + $0x38] sm:$0xf]
  %v38 = vld [vmem:[%s0 + $0x3c] sm:$0xf]
  %v39 = vld [vmem:[%s1] sm:$0xf]
  %v40 = vld [vmem:[%s1 + $0x4] sm:$0xf]
  %v41 = vld [vmem:[%s1 + $0x8] sm:$0xf]
  %v42 = vld [vmem:[%s1 + $0xc] sm:$0xf]
  %v43 = vld [vmem:[%s1 + $0x10] sm:$0xf]
  %v44 = vld [vmem:[%s1 + $0x14] sm:$0xf]
  %v45 = vld [vmem:[%s1 + $0x18] sm:$0xf]
  %v46 = vld [vmem:[%s1 + $0x1c] sm:$0xf]
  %v47 = vld [vmem:[%s1 + $0x20] sm:$0xf]
  %v48 = vld [vmem:[%s1 + $0x24] sm:$0xf]
  %v49 = vld [vmem:[%s1 + $0x28] sm:$0xf]
  %v50 = vld [vmem:[%s1 + $0x2c] sm:$0xf]
  %v51 = vld [vmem:[%s1 + $0x30] sm:$0xf]
  %v52 = vld [vmem:[%s1 + $0x34] sm:$0xf]
  %v53 = vld [vmem:[%s1 + $0x38] sm:$0xf]
  %v54 = vld [vmem:[%s1 + $0x3c] sm:$0xf]
  %v55 = vld [vmem:[%s2] sm:$0x1]
  %v57 = vlaneseq
  %v58 = vshrl.u32 %v57, 7
  %v59 = vsub.s32 0, %v58
  %v60 = vrot.slane %v55, %v59
  %v78 = vunpack.c.l.b16 %v23
  %v79 = vunpack.c.l.b16 %v24
  %v80 = vunpack.c.l.b16 %v25
  %v81 = vunpack.c.l.b16 %v26
  %v82 = vunpack.c.l.b16 %v27
  %v83 = vunpack.c.l.b16 %v28
  %v84 = vunpack.c.l.b16 %v29
  %v85 = vunpack.c.l.b16 %v30
  %v86 = vunpack.c.l.b16 %v31
  %v87 = vunpack.c.l.b16 %v32
  %v88 = vunpack.c.l.b16 %v33
  %v89 = vunpack.c.l.b16 %v34
  %v90 = vunpack.c.l.b16 %v35
  %v91 = vunpack.c.l.b16 %v36
  %v92 = vunpack.c.l.b16 %v37
  %v93 = vunpack.c.l.b16 %v38
  %v94 = vpack.c.b16 %v79, %v78
  %v95 = vpack.c.b16 %v81, %v80
  %v96 = vpack.c.b16 %v83, %v82
  %v97 = vpack.c.b16 %v85, %v84
  %v98 = vpack.c.b16 %v87, %v86
  %v99 = vpack.c.b16 %v89, %v88
  %v100 = vpack.c.b16 %v91, %v90
  %v101 = vpack.c.b16 %v93, %v92
  %v126 = vunpack.c.l.b16 %v39
  %v127 = vunpack.c.l.b16 %v40
  %v128 = vunpack.c.l.b16 %v41
  %v129 = vunpack.c.l.b16 %v42
  %v130 = vunpack.c.l.b16 %v43
  %v131 = vunpack.c.l.b16 %v44
  %v132 = vunpack.c.l.b16 %v45
  %v133 = vunpack.c.l.b16 %v46
  %v134 = vunpack.c.l.b16 %v47
  %v135 = vunpack.c.l.b16 %v48
  %v136 = vunpack.c.l.b16 %v49
  %v137 = vunpack.c.l.b16 %v50
  %v138 = vunpack.c.l.b16 %v51
  %v139 = vunpack.c.l.b16 %v52
  %v140 = vunpack.c.l.b16 %v53
  %v141 = vunpack.c.l.b16 %v54
  %v142 = vpack.c.b16 %v127, %v126
  %v143 = vpack.c.b16 %v129, %v128
  %v144 = vpack.c.b16 %v131, %v130
  %v145 = vpack.c.b16 %v133, %v132
  %v146 = vpack.c.b16 %v135, %v134
  %v147 = vpack.c.b16 %v137, %v136
  %v148 = vpack.c.b16 %v139, %v138
  %v149 = vpack.c.b16 %v141, %v140
  %158 = vmatprep.subr.bf16.mxu0 0
  %159 = vmatpush1.bf16.msra.mxu0 %v142
  %160 = vmatprep.subr.bf16.mxu0 0
  %161 = vmatpush1.bf16.msra.mxu0 %v143
  %162 = vmatprep.subr.bf16.mxu0 0
  %163 = vmatpush1.bf16.msra.mxu0 %v144
  %164 = vmatprep.subr.bf16.mxu0 0
  %165 = vmatpush1.bf16.msra.mxu0 %v145
  %166 = vmatprep.subr.bf16.mxu0 0
  %167 = vmatpush1.bf16.msra.mxu0 %v146
  %168 = vmatprep.subr.bf16.mxu0 0
  %169 = vmatpush1.bf16.msra.mxu0 %v147
  %170 = vmatprep.subr.bf16.mxu0 0
  %171 = vmatpush1.bf16.msra.mxu0 %v148
  %172 = vmatprep.subr.bf16.mxu0 0
  %173 = vmatpush1.bf16.msra.mxu0 %v149
  %174 = vmatprep.subr.bf16.mxu0 0
  %175 = vmatpush1.bf16.msra.mxu0 0
  %176 = vmatprep.subr.bf16.mxu0 0
  %177 = vmatpush1.bf16.msra.mxu0 0
  %178 = vmatprep.subr.bf16.mxu0 0
  %179 = vmatpush1.bf16.msra.mxu0 0
  %180 = vmatprep.subr.bf16.mxu0 0
  %181 = vmatpush1.bf16.msra.mxu0 0
  %182 = vmatprep.subr.bf16.mxu0 0
  %183 = vmatpush1.bf16.msra.mxu0 0
  %184 = vmatprep.subr.bf16.mxu0 0
  %185 = vmatpush1.bf16.msra.mxu0 0
  %186 = vmatprep.subr.bf16.mxu0 0
  %187 = vmatpush1.bf16.msra.mxu0 0
  %188 = vmatprep.subr.bf16.mxu0 0
  %189 = vmatpush1.bf16.msra.mxu0 0
  %190 = vmatprep.mubr.bf16.mxu0 0
  %191 = vmatmul.mubr.bf16.gmra.mrb[0].mxu0 %v94
  %v192 = vpop.f32.mrb[0].mxu0
  %v193 = vadd.f32 %v60, %v192
  %v194 = vpop.f32.mrb[0].mxu0
  %v195 = vpop.f32.mrb[0].mxu0
  %v196 = vadd.f32 %v60, %v195
  %v197 = vpop.f32.mrb[0].mxu0
  %198 = vmatprep.mubr.bf16.mxu0 0
  %199 = vmatmul.mubr.bf16.gmra.mrb[0].mxu0 %v95
  %v200 = vpop.f32.mrb[0].mxu0
  %v201 = vadd.f32 %v60, %v200
  %v202 = vpop.f32.mrb[0].mxu0
  %v203 = vpop.f32.mrb[0].mxu0
  %v204 = vadd.f32 %v60, %v203
  %v205 = vpop.f32.mrb[0].mxu0
  %206 = vmatprep.mubr.bf16.mxu0 0
  %207 = vmatmul.mubr.bf16.gmra.mrb[0].mxu0 %v96
  %v208 = vpop.f32.mrb[0].mxu0
  %v209 = vadd.f32 %v60, %v208
  %v210 = vpop.f32.mrb[0].mxu0
  %v211 = vpop.f32.mrb[0].mxu0
  %v212 = vadd.f32 %v60, %v211
  %v213 = vpop.f32.mrb[0].mxu0
  %214 = vmatprep.mubr.bf16.mxu0 0
  %215 = vmatmul.mubr.bf16.gmra.mrb[0].mxu0 %v97
  %v216 = vpop.f32.mrb[0].mxu0
  %v217 = vadd.f32 %v60, %v216
  %v218 = vpop.f32.mrb[0].mxu0
  %v219 = vpop.f32.mrb[0].mxu0
  %v220 = vadd.f32 %v60, %v219
  %v221 = vpop.f32.mrb[0].mxu0
  %222 = vmatprep.mubr.bf16.mxu0 0
  %223 = vmatmul.mubr.bf16.gmra.mrb[0].mxu0 %v98
  %v224 = vpop.f32.mrb[0].mxu0
  %v225 = vadd.f32 %v60, %v224
  %v226 = vpop.f32.mrb[0].mxu0
  %v227 = vpop.f32.mrb[0].mxu0
  %v228 = vadd.f32 %v60, %v227
  %v229 = vpop.f32.mrb[0].mxu0
  %230 = vmatprep.mubr.bf16.mxu0 0
  %231 = vmatmul.mubr.bf16.gmra.mrb[0].mxu0 %v99
  %v232 = vpop.f32.mrb[0].mxu0
  %v233 = vadd.f32 %v60, %v232
  %v234 = vpop.f32.mrb[0].mxu0
  %v235 = vpop.f32.mrb[0].mxu0
  %v236 = vadd.f32 %v60, %v235
  %v237 = vpop.f32.mrb[0].mxu0
  %238 = vmatprep.mubr.bf16.mxu0 0
  %239 = vmatmul.mubr.bf16.gmra.mrb[0].mxu0 %v100
  %v240 = vpop.f32.mrb[0].mxu0
  %v241 = vadd.f32 %v60, %v240
  %v242 = vpop.f32.mrb[0].mxu0
  %v243 = vpop.f32.mrb[0].mxu0
  %v244 = vadd.f32 %v60, %v243
  %v245 = vpop.f32.mrb[0].mxu0
  %246 = vmatprep.mubr.bf16.mxu0 0
  %247 = vmatmul.mubr.bf16.gmra.mrb[0].mxu0 %v101
  %v248 = vpop.f32.mrb[0].mxu0
  %v249 = vadd.f32 %v60, %v248
  %v250 = vpop.f32.mrb[0].mxu0
  %v251 = vpop.f32.mrb[0].mxu0
  %v252 = vadd.f32 %v60, %v251
  %v253 = vpop.f32.mrb[0].mxu0
  %254 = vdwg.mxu0
  %v255 = vpack.c.bf16 %v196, %v193
  %v256 = vpack.c.bf16 %v204, %v201
  %v257 = vpack.c.bf16 %v212, %v209
  %v258 = vpack.c.bf16 %v220, %v217
  %v259 = vpack.c.bf16 %v228, %v225
  %v260 = vpack.c.bf16 %v236, %v233
  %v261 = vpack.c.bf16 %v244, %v241
  %v262 = vpack.c.bf16 %v252, %v249
  %v263 = vld [vmem:[%s3] sm:$0xf]
  %v264 = vld [vmem:[%s3 + $0x4] sm:$0xf]
  %v265 = vld [vmem:[%s3 + $0x8] sm:$0xf]
  %v266 = vld [vmem:[%s3 + $0xc] sm:$0xf]
  %v267 = vld [vmem:[%s3 + $0x10] sm:$0xf]
  %v268 = vld [vmem:[%s3 + $0x14] sm:$0xf]
  %v269 = vld [vmem:[%s3 + $0x18] sm:$0xf]
  %v270 = vld [vmem:[%s3 + $0x1c] sm:$0xf]
  %v271 = vld [vmem:[%s3 + $0x20] sm:$0xf]
  %v272 = vld [vmem:[%s3 + $0x24] sm:$0xf]
  %v273 = vld [vmem:[%s3 + $0x28] sm:$0xf]
  %v274 = vld [vmem:[%s3 + $0x2c] sm:$0xf]
  %v275 = vld [vmem:[%s3 + $0x30] sm:$0xf]
  %v276 = vld [vmem:[%s3 + $0x34] sm:$0xf]
  %v277 = vld [vmem:[%s3 + $0x38] sm:$0xf]
  %v278 = vld [vmem:[%s3 + $0x3c] sm:$0xf]
  %v279 = vld [vmem:[%s4] sm:$0x1]
  %v281 = vlaneseq
  %v282 = vshrl.u32 %v281, 7
  %v283 = vsub.s32 0, %v282
  %v284 = vrot.slane %v279, %v283
  %v302 = vunpack.c.l.b16 %v263
  %v303 = vunpack.c.l.b16 %v264
  %v304 = vunpack.c.l.b16 %v265
  %v305 = vunpack.c.l.b16 %v266
  %v306 = vunpack.c.l.b16 %v267
  %v307 = vunpack.c.l.b16 %v268
  %v308 = vunpack.c.l.b16 %v269
  %v309 = vunpack.c.l.b16 %v270
  %v310 = vunpack.c.l.b16 %v271
  %v311 = vunpack.c.l.b16 %v272
  %v312 = vunpack.c.l.b16 %v273
  %v313 = vunpack.c.l.b16 %v274
  %v314 = vunpack.c.l.b16 %v275
  %v315 = vunpack.c.l.b16 %v276
  %v316 = vunpack.c.l.b16 %v277
  %v317 = vunpack.c.l.b16 %v278
  %v318 = vpack.c.b16 %v303, %v302
  %v319 = vpack.c.b16 %v305, %v304
  %v320 = vpack.c.b16 %v307, %v306
  %v321 = vpack.c.b16 %v309, %v308
  %v322 = vpack.c.b16 %v311, %v310
  %v323 = vpack.c.b16 %v313, %v312
  %v324 = vpack.c.b16 %v315, %v314
  %v325 = vpack.c.b16 %v317, %v316
  %334 = vmatprep.subr.bf16.mxu0 0
  %335 = vmatpush1.bf16.msra.mxu0 %v318
  %336 = vmatprep.subr.bf16.mxu0 0
  %337 = vmatpush1.bf16.msra.mxu0 %v319
  %338 = vmatprep.subr.bf16.mxu0 0
  %339 = vmatpush1.bf16.msra.mxu0 %v320
  %340 = vmatprep.subr.bf16.mxu0 0
  %341 = vmatpush1.bf16.msra.mxu0 %v321
  %342 = vmatprep.subr.bf16.mxu0 0
  %343 = vmatpush1.bf16.msra.mxu0 %v322
  %344 = vmatprep.subr.bf16.mxu0 0
  %345 = vmatpush1.bf16.msra.mxu0 %v323
  %346 = vmatprep.subr.bf16.mxu0 0
  %347 = vmatpush1.bf16.msra.mxu0 %v324
  %348 = vmatprep.subr.bf16.mxu0 0
  %349 = vmatpush1.bf16.msra.mxu0 %v325
  %350 = vmatprep.subr.bf16.mxu0 0
  %351 = vmatpush1.bf16.msra.mxu0 0
  %352 = vmatprep.subr.bf16.mxu0 0
  %353 = vmatpush1.bf16.msra.mxu0 0
  %354 = vmatprep.subr.bf16.mxu0 0
  %355 = vmatpush1.bf16.msra.mxu0 0
  %356 = vmatprep.subr.bf16.mxu0 0
  %357 = vmatpush1.bf16.msra.mxu0 0
  %358 = vmatprep.subr.bf16.mxu0 0
  %359 = vmatpush1.bf16.msra.mxu0 0
  %360 = vmatprep.subr.bf16.mxu0 0
  %361 = vmatpush1.bf16.msra.mxu0 0
  %362 = vmatprep.subr.bf16.mxu0 0
  %363 = vmatpush1.bf16.msra.mxu0 0
  %364 = vmatprep.subr.bf16.mxu0 0
  %365 = vmatpush1.bf16.msra.mxu0 0
  %366 = vmatprep.mubr.bf16.mxu0 0
  %367 = vmatmul.mubr.bf16.gmra.mrb[0].mxu0 %v255
  %v368 = vpop.f32.mrb[0].mxu0
  %v369 = vadd.f32 %v284, %v368
  %v370 = vpop.f32.mrb[0].mxu0
  %v371 = vpop.f32.mrb[0].mxu0
  %v372 = vadd.f32 %v284, %v371
  %v373 = vpop.f32.mrb[0].mxu0
  %374 = vmatprep.mubr.bf16.mxu0 0
  %375 = vmatmul.mubr.bf16.gmra.mrb[0].mxu0 %v256
  %v376 = vpop.f32.mrb[0].mxu0
  %v377 = vadd.f32 %v284, %v376
  %v378 = vpop.f32.mrb[0].mxu0
  %v379 = vpop.f32.mrb[0].mxu0
  %v380 = vadd.f32 %v284, %v379
  %v381 = vpop.f32.mrb[0].mxu0
  %382 = vmatprep.mubr.bf16.mxu0 0
  %383 = vmatmul.mubr.bf16.gmra.mrb[0].mxu0 %v257
  %v384 = vpop.f32.mrb[0].mxu0
  %v385 = vadd.f32 %v284, %v384
  %v386 = vpop.f32.mrb[0].mxu0
  %v387 = vpop.f32.mrb[0].mxu0
  %v388 = vadd.f32 %v284, %v387
  %v389 = vpop.f32.mrb[0].mxu0
  %390 = vmatprep.mubr.bf16.mxu0 0
  %391 = vmatmul.mubr.bf16.gmra.mrb[0].mxu0 %v258
  %v392 = vpop.f32.mrb[0].mxu0
  %v393 = vadd.f32 %v284, %v392
  %v394 = vpop.f32.mrb[0].mxu0
  %v395 = vpop.f32.mrb[0].mxu0
  %v396 = vadd.f32 %v284, %v395
  %v397 = vpop.f32.mrb[0].mxu0
  %398 = vmatprep.mubr.bf16.mxu0 0
  %399 = vmatmul.mubr.bf16.gmra.mrb[0].mxu0 %v259
  %v400 = vpop.f32.mrb[0].mxu0
  %v401 = vadd.f32 %v284, %v400
  %v402 = vpop.f32.mrb[0].mxu0
  %v403 = vpop.f32.mrb[0].mxu0
  %v404 = vadd.f32 %v284, %v403
  %v405 = vpop.f32.mrb[0].mxu0
  %406 = vmatprep.mubr.bf16.mxu0 0
  %407 = vmatmul.mubr.bf16.gmra.mrb[0].mxu0 %v260
  %v408 = vpop.f32.mrb[0].mxu0
  %v409 = vadd.f32 %v284, %v408
  %v410 = vpop.f32.mrb[0].mxu0
  %v411 = vpop.f32.mrb[0].mxu0
  %v412 = vadd.f32 %v284, %v411
  %v413 = vpop.f32.mrb[0].mxu0
  %414 = vmatprep.mubr.bf16.mxu0 0
  %415 = vmatmul.mubr.bf16.gmra.mrb[0].mxu0 %v261
  %v416 = vpop.f32.mrb[0].mxu0
  %v417 = vadd.f32 %v284, %v416
  %v418 = vpop.f32.mrb[0].mxu0
  %v419 = vpop.f32.mrb[0].mxu0
  %v420 = vadd.f32 %v284, %v419
  %v421 = vpop.f32.mrb[0].mxu0
  %422 = vmatprep.mubr.bf16.mxu0 0
  %423 = vmatmul.mubr.bf16.gmra.mrb[0].mxu0 %v262
  %v424 = vpop.f32.mrb[0].mxu0
  %v425 = vadd.f32 %v284, %v424
  %v426 = vpop.f32.mrb[0].mxu0
  %v427 = vpop.f32.mrb[0].mxu0
  %v428 = vadd.f32 %v284, %v427
  %v429 = vpop.f32.mrb[0].mxu0
  %430 = vdwg.mxu0
  %431 = vst [vmem:[%s6] sm:$0xff] %v369
  %432 = vst [vmem:[%s6 + $0x8] sm:$0xff] %v372
  %433 = vst [vmem:[%s6 + $0x10] sm:$0xff] %v377
  %434 = vst [vmem:[%s6 + $0x18] sm:$0xff] %v380
  %435 = vst [vmem:[%s6 + $0x20] sm:$0xff] %v385
  %436 = vst [vmem:[%s6 + $0x28] sm:$0xff] %v388
  %437 = vst [vmem:[%s6 + $0x30] sm:$0xff] %v393
  %438 = vst [vmem:[%s6 + $0x38] sm:$0xff] %v396
  %439 = vst [vmem:[%s6 + $0x40] sm:$0xff] %v401
  %440 = vst [vmem:[%s6 + $0x48] sm:$0xff] %v404
  %441 = vst [vmem:[%s6 + $0x50] sm:$0xff] %v409
  %442 = vst [vmem:[%s6 + $0x58] sm:$0xff] %v412
  %443 = vst [vmem:[%s6 + $0x60] sm:$0xff] %v417
  %444 = vst [vmem:[%s6 + $0x68] sm:$0xff] %v420
  %445 = vst [vmem:[%s6 + $0x70] sm:$0xff] %v425
  %446 = vst [vmem:[%s6 + $0x78] sm:$0xff] %v428
  %v447 = vpack.c.bf16 %v372, %v369
  %v448 = vpack.c.bf16 %v380, %v377
  %v449 = vpack.c.bf16 %v388, %v385
  %v450 = vpack.c.bf16 %v396, %v393
  %v451 = vpack.c.bf16 %v404, %v401
  %v452 = vpack.c.bf16 %v412, %v409
  %v453 = vpack.c.bf16 %v420, %v417
  %v454 = vpack.c.bf16 %v428, %v425
  %455 = vmatprep.subr.bf16.mxu0 0
  %456 = vmatpush1.bf16.xpose.msra.mxu0 %v447
  %457 = vmatprep.subr.bf16.mxu0 0
  %458 = vmatpush1.bf16.xpose.msra.mxu0 %v448
  %459 = vmatprep.subr.bf16.mxu0 0
  %460 = vmatpush1.bf16.xpose.msra.mxu0 %v449
  %461 = vmatprep.subr.bf16.mxu0 0
  %462 = vmatpush1.bf16.xpose.msra.mxu0 %v450
  %463 = vmatprep.subr.bf16.mxu0 0
  %464 = vmatpush1.bf16.xpose.msra.mxu0 %v451
  %465 = vmatprep.subr.bf16.mxu0 0
  %466 = vmatpush1.bf16.xpose.msra.mxu0 %v452
  %467 = vmatprep.subr.bf16.mxu0 0
  %468 = vmatpush1.bf16.xpose.msra.mxu0 %v453
  %469 = vmatprep.subr.bf16.mxu0 0
  %470 = vmatpush1.bf16.xpose.msra.mxu0 %v454
  %471 = vmatprep.subr.bf16.mxu0 0
  %472 = vmatpush1.bf16.xpose.msra.mxu0 0
  %473 = vmatprep.subr.bf16.mxu0 0
  %474 = vmatpush1.bf16.xpose.msra.mxu0 0
  %475 = vmatprep.subr.bf16.mxu0 0
  %476 = vmatpush1.bf16.xpose.msra.mxu0 0
  %477 = vmatprep.subr.bf16.mxu0 0
  %478 = vmatpush1.bf16.xpose.msra.mxu0 0
  %479 = vmatprep.subr.bf16.mxu0 0
  %480 = vmatpush1.bf16.xpose.msra.mxu0 0
  %481 = vmatprep.subr.bf16.mxu0 0
  %482 = vmatpush1.bf16.xpose.msra.mxu0 0
  %483 = vmatprep.subr.bf16.mxu0 0
  %484 = vmatpush1.bf16.xpose.msra.mxu0 0
  %485 = vmatprep.subr.bf16.mxu0 0
  %486 = vmatpush1.bf16.xpose.msra.mxu0 0
  %487 = vmatprep.mubr.bf16.mxu0 0
  %488 = vmatmul.mubr.bf16.gmra.mrb[0].mxu0 %v447
  %v489 = vpop.f32.mrb[0].mxu0
  %v490 = vadd.f32 0.0, %v489
  %v491 = vpop.f32.mrb[0].mxu0
  %v492 = vpop.f32.mrb[0].mxu0
  %v493 = vadd.f32 0.0, %v492
  %v494 = vpop.f32.mrb[0].mxu0
  %495 = vmatprep.mubr.bf16.mxu0 0
  %496 = vmatmul.mubr.bf16.gmra.mrb[0].mxu0 %v448
  %v497 = vpop.f32.mrb[0].mxu0
  %v498 = vadd.f32 0.0, %v497
  %v499 = vpop.f32.mrb[0].mxu0
  %v500 = vpop.f32.mrb[0].mxu0
  %v501 = vadd.f32 0.0, %v500
  %v502 = vpop.f32.mrb[0].mxu0
  %503 = vmatprep.mubr.bf16.mxu0 0
  %504 = vmatmul.mubr.bf16.gmra.mrb[0].mxu0 %v449
  %v505 = vpop.f32.mrb[0].mxu0
  %v506 = vadd.f32 0.0, %v505
  %v507 = vpop.f32.mrb[0].mxu0
  %v508 = vpop.f32.mrb[0].mxu0
  %v509 = vadd.f32 0.0, %v508
  %v510 = vpop.f32.mrb[0].mxu0
  %511 = vmatprep.mubr.bf16.mxu0 0
  %512 = vmatmul.mubr.bf16.gmra.mrb[0].mxu0 %v450
  %v513 = vpop.f32.mrb[0].mxu0
  %v514 = vadd.f32 0.0, %v513
  %v515 = vpop.f32.mrb[0].mxu0
  %v516 = vpop.f32.mrb[0].mxu0
  %v517 = vadd.f32 0.0, %v516
  %v518 = vpop.f32.mrb[0].mxu0
  %519 = vmatprep.mubr.bf16.mxu0 0
  %520 = vmatmul.mubr.bf16.gmra.mrb[0].mxu0 %v451
  %v521 = vpop.f32.mrb[0].mxu0
  %v522 = vadd.f32 0.0, %v521
  %v523 = vpop.f32.mrb[0].mxu0
  %v524 = vpop.f32.mrb[0].mxu0
  %v525 = vadd.f32 0.0, %v524
  %v526 = vpop.f32.mrb[0].mxu0
  %527 = vmatprep.mubr.bf16.mxu0 0
  %528 = vmatmul.mubr.bf16.gmra.mrb[0].mxu0 %v452
  %v529 = vpop.f32.mrb[0].mxu0
  %v530 = vadd.f32 0.0, %v529
  %v531 = vpop.f32.mrb[0].mxu0
  %v532 = vpop.f32.mrb[0].mxu0
  %v533 = vadd.f32 0.0, %v532
  %v534 = vpop.f32.mrb[0].mxu0
  %535 = vmatprep.mubr.bf16.mxu0 0
  %536 = vmatmul.mubr.bf16.gmra.mrb[0].mxu0 %v453
  %v537 = vpop.f32.mrb[0].mxu0
  %v538 = vadd.f32 0.0, %v537
  %v539 = vpop.f32.mrb[0].mxu0
  %v540 = vpop.f32.mrb[0].mxu0
  %v541 = vadd.f32 0.0, %v540
  %v542 = vpop.f32.mrb[0].mxu0
  %543 = vmatprep.mubr.bf16.mxu0 0
  %544 = vmatmul.mubr.bf16.gmra.mrb[0].mxu0 %v454
  %v545 = vpop.f32.mrb[0].mxu0
  %v546 = vadd.f32 0.0, %v545
  %v547 = vpop.f32.mrb[0].mxu0
  %v548 = vpop.f32.mrb[0].mxu0
  %v549 = vadd.f32 0.0, %v548
  %v550 = vpop.f32.mrb[0].mxu0
  %551 = vdwg.mxu0
  %v552 = vpack.c.bf16 %v493, %v490
  %v553 = vpack.c.bf16 %v501, %v498
  %v554 = vpack.c.bf16 %v509, %v506
  %v555 = vpack.c.bf16 %v517, %v514
  %v556 = vpack.c.bf16 %v525, %v522
  %v557 = vpack.c.bf16 %v533, %v530
  %v558 = vpack.c.bf16 %v541, %v538
  %v559 = vpack.c.bf16 %v549, %v546
  %v568 = vunpack.c.l.b16 %v552
  %v569 = vunpack.c.h.b16 %v552
  %v570 = vunpack.c.l.b16 %v553
  %v571 = vunpack.c.h.b16 %v553
  %v572 = vunpack.c.l.b16 %v554
  %v573 = vunpack.c.h.b16 %v554
  %v574 = vunpack.c.l.b16 %v555
  %v575 = vunpack.c.h.b16 %v555
  %v576 = vunpack.c.l.b16 %v556
  %v577 = vunpack.c.h.b16 %v556
  %v578 = vunpack.c.l.b16 %v557
  %v579 = vunpack.c.h.b16 %v557
  %v580 = vunpack.c.l.b16 %v558
  %v581 = vunpack.c.h.b16 %v558
  %v582 = vunpack.c.l.b16 %v559
  %v583 = vunpack.c.h.b16 %v559
  %v584 = vpack.c.b16 %v568, %v568
  %v585 = vpack.c.b16 %v569, %v569
  %v586 = vpack.c.b16 %v570, %v570
  %v587 = vpack.c.b16 %v571, %v571
  %v588 = vpack.c.b16 %v572, %v572
  %v589 = vpack.c.b16 %v573, %v573
  %v590 = vpack.c.b16 %v574, %v574
  %v591 = vpack.c.b16 %v575, %v575
  %v592 = vpack.c.b16 %v576, %v576
  %v593 = vpack.c.b16 %v577, %v577
  %v594 = vpack.c.b16 %v578, %v578
  %v595 = vpack.c.b16 %v579, %v579
  %v596 = vpack.c.b16 %v580, %v580
  %v597 = vpack.c.b16 %v581, %v581
  %v598 = vpack.c.b16 %v582, %v582
  %v599 = vpack.c.b16 %v583, %v583
  %616 = vst [vmem:[%s5] sm:$0xf] %v584
  %617 = vst [vmem:[%s5 + $0x4] sm:$0xf] %v585
  %618 = vst [vmem:[%s5 + $0x8] sm:$0xf] %v586
  %619 = vst [vmem:[%s5 + $0xc] sm:$0xf] %v587
  %620 = vst [vmem:[%s5 + $0x10] sm:$0xf] %v588
  %621 = vst [vmem:[%s5 + $0x14] sm:$0xf] %v589
  %622 = vst [vmem:[%s5 + $0x18] sm:$0xf] %v590
  %623 = vst [vmem:[%s5 + $0x1c] sm:$0xf] %v591
  %624 = vst [vmem:[%s5 + $0x20] sm:$0xf] %v592
  %625 = vst [vmem:[%s5 + $0x24] sm:$0xf] %v593
  %626 = vst [vmem:[%s5 + $0x28] sm:$0xf] %v594
  %627 = vst [vmem:[%s5 + $0x2c] sm:$0xf] %v595
  %628 = vst [vmem:[%s5 + $0x30] sm:$0xf] %v596
  %629 = vst [vmem:[%s5 + $0x34] sm:$0xf] %v597
  %630 = vst [vmem:[%s5 + $0x38] sm:$0xf] %v598
  %631 = vst [vmem:[%s5 + $0x3c] sm:$0xf] %v599
  // Predicated region
  $region22: #{ae_forward.1} parent=0 // pred_check
    _
  $region23: #{ae_forward.1} parent=0 // pred_check_branch
    %633 = sbr.rel (0) target = $region25
  $region24: #{ae_forward.1} parent=0 // pred_region
    _
  $region25: #{ae_forward.1} parent=0 // pred_fallthru
    _
  // Predicated region
  $region26: #{ae_forward.1} parent=0 // pred_check
    _
  $region27: #{ae_forward.1} parent=0 // pred_check_branch
    %635 = sbr.rel (0) target = $region29
  $region28: #{ae_forward.1} parent=0 // pred_region
    _
  $region29: #{ae_forward.1} parent=0 // pred_fallthru
    _
  // Predicated region
  $region30: #{ae_forward.1} parent=0 // pred_check
    _
  $region31: #{ae_forward.1} parent=0 // pred_check_branch
    %637 = sbr.rel (0) target = $region33
  $region32: #{ae_forward.1} parent=0 // pred_region
    _
  $region33: #{ae_forward.1} parent=0 // pred_fallthru
    _
  // Predicated region
  $region34: #{ae_forward.1} parent=0 // pred_check
    _
  $region35: #{ae_forward.1} parent=0 // pred_check_branch
    %639 = sbr.rel (0) target = $region37
  $region36: #{ae_forward.1} parent=0 // pred_region
    _
  $region37: #{ae_forward.1} parent=0 // pred_fallthru
    _

</llo_original>
